<compile_context>
chip_gen: v7x
topology: tpu7x:2x2x1
jax: 0.10.0
libtpu: 0.0.40
codegen_flags: <defaults>
</compile_context>

<pallas_src>
import math

import jax
import jax.numpy as jnp
from jax.experimental import pallas as pl
from jax.experimental.pallas import tpu as pltpu


def _round_up(x, m):
    return (x + m - 1) // m * m


def logit_fc_kernel(x_ref, w1_ref, b1_ref, gamma_ref, beta_ref, w2_ref, b2_ref,
                    out_ref, hn_ref):
    """Fused: Linear(H -> 2H) -> GeLU(erf) -> LayerNorm(2H, eps=1e-12)
              -> Linear(2H -> logits), streamed over the logits grid axis.

    Grid = (batch_tiles, n_tiles). The prologue (Linear1/GeLU/LayerNorm) runs
    only at program_id(1) == 0 and is cached in hn_ref (VMEM scratch, bf16);
    every N step then only computes hn @ w2_tile + b2_tile, so the streamed
    w2 DMA overlaps the MXU work of the previous tile.
    """
    @pl.when(pl.program_id(1) == 0)
    def _():
        # Linear 1 (bf16 operands, f32 accumulation on the MXU)
        h = jnp.dot(x_ref[...], w1_ref[...],
                    preferred_element_type=jnp.float32) + b1_ref[...]

        # BERT GeLU: h * 0.5 * (1 + erf(h / sqrt(2)))
        h = h * 0.5 * (1.0 + jax.lax.erf(h * (1.0 / math.sqrt(2.0))))

        # BertLayerNorm over the TRUE H2 width (H2 is never padded/tiled),
        # eps inside the sqrt; rsqrt goes to the EUP slot.
        mu = jnp.mean(h, axis=-1, keepdims=True)
        var = jnp.mean((h - mu) ** 2, axis=-1, keepdims=True)
        # NOTE: padded (all-zero) batch rows can hit var == 0 -> rsqrt(1e-12)
        # ~ 1e6, but it multiplies (h - mu) == 0, so no NaN; those rows are
        # sliced off in the wrapper.  Do NOT "fix" this by removing the eps.
        hn = (h - mu) * jax.lax.rsqrt(var + 1e-12)
        hn = hn * gamma_ref[...] + beta_ref[...]
        hn_ref[...] = hn.astype(hn_ref.dtype)

    # Linear 2 on the current (H2, TN) streamed weight tile (bf16 x bf16, f32 acc)
    out = jnp.dot(hn_ref[...], w2_ref[...],
                  preferred_element_type=jnp.float32) + b2_ref[...]
    out_ref[...] = out.astype(out_ref.dtype)


def _build_call(TB, TN, H, H2, Bp, Np, single_buffer_consts):
    """Constructs the pallas_call for the given tiling."""
    const_kw = {}
    if single_buffer_consts:
        # Index-constant blocks: re-DMA is already skipped for unchanged block
        # indices, so the second pipeline buffer is pure VMEM waste.
        const_kw = dict(pipeline_mode=pl.Buffered(1))

    grid = (Bp // TB, Np // TN)
    return pl.pallas_call(
        logit_fc_kernel,
        out_shape=jax.ShapeDtypeStruct((Bp, Np), jnp.float32),
        grid=grid,
        in_specs=[
            pl.BlockSpec((TB, H), lambda i, j: (i, 0)),               # x (bf16, batch-tiled)
            pl.BlockSpec((H, H2), lambda i, j: (0, 0), **const_kw),   # w1 (bf16, resident)
            pl.BlockSpec((1, H2), lambda i, j: (0, 0), **const_kw),   # b1
            pl.BlockSpec((1, H2), lambda i, j: (0, 0), **const_kw),   # gamma
            pl.BlockSpec((1, H2), lambda i, j: (0, 0), **const_kw),   # beta
            pl.BlockSpec((H2, TN), lambda i, j: (0, j)),              # w2 (bf16, streamed over N)
            pl.BlockSpec((1, TN), lambda i, j: (0, j)),               # b2 (streamed over N)
        ],
        out_specs=pl.BlockSpec((TB, TN), lambda i, j: (i, j)),
        scratch_shapes=[pltpu.VMEM((TB, H2), jnp.bfloat16)],          # cached hn
        compiler_params=pltpu.CompilerParams(
            # Batch tiles are independent -> "parallel" (shards across v7x's
            # 2 TensorCores; neutral on single-TC v5e/v6e).  The logits axis
            # reuses the hn scratch within a batch tile -> "arbitrary".
            dimension_semantics=("parallel", "arbitrary"),
            # Raise the default scoped-VMEM limit (16 MiB on v5e, 32 MiB on
            # v6e/v7x) so real LXMERT shapes (H2=1536, ~10k logits) fit the
            # streamed w1 + w2-tile + out-tile footprint on every generation
            # while staying under v7x's 64 MiB physical VMEM.
            vmem_limit_bytes=48 * 1024 * 1024,
        ),
    )


def lxmert_localizer_head(x, params, *, height, width):
    """Runs the Pallas kernel for self.logit_fc and reshapes to (B, H, W)."""
    w1, b1, gamma, beta, w2, b2 = (
        params["w1"], params["b1"], params["gamma"],
        params["beta"], params["w2"], params["b2"],
    )
    B, H = x.shape
    H2 = w1.shape[1]
    num_logits = w2.shape[1]
    assert num_logits == height * width
    # b2 must stay 2-D (1, num_logits) for the lane-pad below to be valid.
    assert b2.ndim == 2 and b2.shape[0] == 1

    # ---- logits (N) tiling: lane-dense tile (multiple of 128).  TN ~ 1024 at
    # real LXMERT shapes streams w2 with little pad waste; tiny heads collapse
    # to a single 128-wide tile.
    TN = min(1024, _round_up(num_logits, 128))
    Np = _round_up(num_logits, TN)
    if Np != num_logits:
        w2 = jnp.pad(w2, ((0, 0), (0, Np - num_logits)))
        b2 = jnp.pad(b2, ((0, 0), (0, Np - num_logits)))

    # ---- batch tiling (sublane aligned).  Larger TB amortizes the w2 stream,
    # which is re-fetched once per batch tile in this batch-outer layout.
    if B >= 256:
        TB = 256
    elif B >= 128:
        TB = 128
    else:
        TB = _round_up(max(B, 16), 16)
    Bp = _round_up(B, TB)
    if Bp != B:
        x = jnp.pad(x, ((0, Bp - B), (0, 0)))
    # Stream x as bf16 (halves activation DMA); MXU still accumulates in f32.
    x = x.astype(jnp.bfloat16)

    args = (x, w1, b1, gamma, beta, w2, b2)
    try:
        out = _build_call(TB, TN, H, H2, Bp, Np, single_buffer_consts=True)(*args)
    except Exception:
        # Fallback if this JAX build rejects pl.Buffered(1) single-buffering.
        out = _build_call(TB, TN, H, H2, Bp, Np, single_buffer_consts=False)(*args)

    return out[:B, :num_logits].reshape(B, height, width)


def init_params(key, hid_dim, num_logits):
    """Deterministic init matching init_bert_weights: Linear weight ~ N(0, 0.02),
    Linear bias = 0, LayerNorm gamma = 1, beta = 0.  Weights stored bf16."""
    k1, k2 = jax.random.split(key)
    h2 = hid_dim * 2
    return {
        "w1": (0.02 * jax.random.normal(k1, (hid_dim, h2), jnp.float32)
               ).astype(jnp.bfloat16),
        "b1": jnp.zeros((1, h2), jnp.float32),
        "gamma": jnp.ones((1, h2), jnp.float32),
        "beta": jnp.zeros((1, h2), jnp.float32),
        "w2": (0.02 * jax.random.normal(k2, (h2, num_logits), jnp.float32)
               ).astype(jnp.bfloat16),
        "b2": jnp.zeros((1, num_logits), jnp.float32),
    }


def reference_head(x, params, *, height, width):
    """Pure-JAX f32 reference of the same forward (bf16 weights upcast)."""
    w1 = params["w1"].astype(jnp.float32)
    w2 = params["w2"].astype(jnp.float32)
    h = x @ w1 + params["b1"]
    h = h * 0.5 * (1.0 + jax.lax.erf(h / math.sqrt(2.0)))
    mu = jnp.mean(h, axis=-1, keepdims=True)
    var = jnp.mean((h - mu) ** 2, axis=-1, keepdims=True)
    hn = (h - mu) / jnp.sqrt(var + 1e-12)
    hn = hn * params["gamma"] + params["beta"]
    out = hn @ w2 + params["b2"]
    return out.reshape(x.shape[0], height, width)


if __name__ == "__main__":
    # Small shapes consistent with the module: LXMERT pooled output (B, hid_dim),
    # logit grid of height x width.
    batch = 2
    hid_dim = 32
    height, width = 8, 8
    num_logits = height * width

    key = jax.random.PRNGKey(0)
    k_params, k_x = jax.random.split(key)
    params = init_params(k_params, hid_dim, num_logits)

    # Synthetic stand-in for the LXRT encoder pooled output (see TODO above).
    x = jax.random.normal(k_x, (batch, hid_dim), jnp.float32)

    logit = lxmert_localizer_head(x, params, height=height, width=width)
    logit = jax.block_until_ready(logit)

    ref = reference_head(x, params, height=height, width=width)
    assert logit.shape == (batch, height, width)
    # bf16 activation/weight path vs f32 reference -> loosened tolerance.
    if not jnp.allclose(logit, ref, atol=2e-2, rtol=2e-2):
        raise RuntimeError("Pallas kernel result mismatch vs JAX reference")

    print("KERNEL_OK")
</pallas_src>

<mosaic_0001>
module attributes {stable_mosaic.version = 11 : i64} {
  func.func @logit_fc_kernel(%arg0: i32, %arg1: i32, %arg2: memref<16x32xbf16, #tpu.memory_space<vmem>>, %arg3: memref<32x64xbf16, #tpu.memory_space<vmem>>, %arg4: memref<1x64xf32, #tpu.memory_space<vmem>>, %arg5: memref<1x64xf32, #tpu.memory_space<vmem>>, %arg6: memref<1x64xf32, #tpu.memory_space<vmem>>, %arg7: memref<64x128xbf16, #tpu.memory_space<vmem>>, %arg8: memref<1x128xf32, #tpu.memory_space<vmem>>, %arg9: memref<16x128xf32, #tpu.memory_space<vmem>>, %arg10: memref<16x64xbf16, #tpu.memory_space<vmem>>) attributes {dimension_semantics = [#tpu.dimension_semantics<parallel>, #tpu.dimension_semantics<arbitrary>], iteration_bounds = array<i64: 1, 1>, scalar_prefetch = 0 : i64, scratch_operands = 1 : i64, tpu.core_type = #tpu.core_type<tc>, window_params = [{transform_indices = @transform_0, window_bounds = array<i64: 16, 32>}, {pipeline_mode = #tpu.pipeline_mode<synchronous>, transform_indices = @transform_1, window_bounds = array<i64: 32, 64>}, {pipeline_mode = #tpu.pipeline_mode<synchronous>, transform_indices = @transform_2, window_bounds = array<i64: 1, 64>}, {pipeline_mode = #tpu.pipeline_mode<synchronous>, transform_indices = @transform_3, window_bounds = array<i64: 1, 64>}, {pipeline_mode = #tpu.pipeline_mode<synchronous>, transform_indices = @transform_4, window_bounds = array<i64: 1, 64>}, {transform_indices = @transform_5, window_bounds = array<i64: 64, 128>}, {transform_indices = @transform_6, window_bounds = array<i64: 1, 128>}, {transform_indices = @transform_7, window_bounds = array<i64: 16, 128>}]} {
    %c0_i32 = arith.constant 0 : i32
    %0 = arith.cmpi eq, %arg1, %c0_i32 : i32
    %1 = arith.extui %0 : i1 to i32
    %c0_i32_0 = arith.constant 0 : i32
    %2 = arith.cmpi ne, %1, %c0_i32_0 : i32
    scf.if %2 {
      %c0_8 = arith.constant 0 : index
      %c0_9 = arith.constant 0 : index
      %10 = vector.load %arg2[%c0_8, %c0_9] : memref<16x32xbf16, #tpu.memory_space<vmem>>, vector<16x32xbf16>
      %c0_10 = arith.constant 0 : index
      %c0_11 = arith.constant 0 : index
      %11 = vector.load %arg3[%c0_10, %c0_11] : memref<32x64xbf16, #tpu.memory_space<vmem>>, vector<32x64xbf16>
      %cst_12 = arith.constant dense<0.000000e+00> : vector<16x64xf32>
      %12 = tpu.matmul %10, %11, %cst_12 {dimension_numbers = #tpu.dot_dimension_numbers<[1], [0], [0], [1], [0, 0, 1, 1], [], []>} : vector<16x32xbf16>, vector<32x64xbf16>, vector<16x64xf32> -> vector<16x64xf32>
      %c0_13 = arith.constant 0 : index
      %c0_14 = arith.constant 0 : index
      %13 = vector.load %arg4[%c0_13, %c0_14] : memref<1x64xf32, #tpu.memory_space<vmem>>, vector<1x64xf32>
      %14 = vector.broadcast %13 : vector<1x64xf32> to vector<16x64xf32>
      %15 = arith.addf %12, %14 : vector<16x64xf32>
      %cst_15 = arith.constant 5.000000e-01 : f32
      %16 = vector.broadcast %cst_15 : f32 to vector<16x64xf32>
      %17 = arith.mulf %15, %16 : vector<16x64xf32>
      %cst_16 = arith.constant 0.707106769 : f32
      %18 = vector.broadcast %cst_16 : f32 to vector<16x64xf32>
      %19 = arith.mulf %15, %18 : vector<16x64xf32>
      %20 = math.erf %19 : vector<16x64xf32>
      %cst_17 = arith.constant 1.000000e+00 : f32
      %21 = vector.broadcast %cst_17 : f32 to vector<16x64xf32>
      %22 = arith.addf %21, %20 : vector<16x64xf32>
      %23 = arith.mulf %17, %22 : vector<16x64xf32>
      %cst_18 = arith.constant dense<0.000000e+00> : vector<16xf32>
      %24 = vector.multi_reduction <add>, %23, %cst_18 [1] : vector<16x64xf32> to vector<16xf32>
      %25 = vector.shape_cast %24 : vector<16xf32> to vector<16x1xf32>
      %cst_19 = arith.constant 6.400000e+01 : f32
      %26 = vector.broadcast %cst_19 : f32 to vector<16x1xf32>
      %27 = arith.divf %25, %26 : vector<16x1xf32>
      %28 = vector.broadcast %27 : vector<16x1xf32> to vector<16x64xf32>
      %29 = arith.subf %23, %28 : vector<16x64xf32>
      %30 = arith.mulf %29, %29 : vector<16x64xf32>
      %cst_20 = arith.constant dense<0.000000e+00> : vector<16xf32>
      %31 = vector.multi_reduction <add>, %30, %cst_20 [1] : vector<16x64xf32> to vector<16xf32>
      %32 = vector.shape_cast %31 : vector<16xf32> to vector<16x1xf32>
      %cst_21 = arith.constant 6.400000e+01 : f32
      %33 = vector.broadcast %cst_21 : f32 to vector<16x1xf32>
      %34 = arith.divf %32, %33 : vector<16x1xf32>
      %35 = vector.broadcast %27 : vector<16x1xf32> to vector<16x64xf32>
      %36 = arith.subf %23, %35 : vector<16x64xf32>
      %cst_22 = arith.constant 9.99999996E-13 : f32
      %37 = vector.broadcast %cst_22 : f32 to vector<16x1xf32>
      %38 = arith.addf %34, %37 : vector<16x1xf32>
      %39 = math.rsqrt %38 : vector<16x1xf32>
      %40 = vector.broadcast %39 : vector<16x1xf32> to vector<16x64xf32>
      %41 = arith.mulf %36, %40 : vector<16x64xf32>
      %c0_23 = arith.constant 0 : index
      %c0_24 = arith.constant 0 : index
      %42 = vector.load %arg5[%c0_23, %c0_24] : memref<1x64xf32, #tpu.memory_space<vmem>>, vector<1x64xf32>
      %43 = vector.broadcast %42 : vector<1x64xf32> to vector<16x64xf32>
      %44 = arith.mulf %41, %43 : vector<16x64xf32>
      %c0_25 = arith.constant 0 : index
      %c0_26 = arith.constant 0 : index
      %45 = vector.load %arg6[%c0_25, %c0_26] : memref<1x64xf32, #tpu.memory_space<vmem>>, vector<1x64xf32>
      %46 = vector.broadcast %45 : vector<1x64xf32> to vector<16x64xf32>
      %47 = arith.addf %44, %46 : vector<16x64xf32>
      %48 = arith.truncf %47 : vector<16x64xf32> to vector<16x64xbf16>
      %c0_27 = arith.constant 0 : index
      %c0_28 = arith.constant 0 : index
      %49 = vector.load %arg10[%c0_27, %c0_28] : memref<16x64xbf16, #tpu.memory_space<vmem>>, vector<16x64xbf16>
      tpu.vector_store %arg10[%c0_27, %c0_28], %48 {strides = array<i32>} : memref<16x64xbf16, #tpu.memory_space<vmem>>, vector<16x64xbf16>,
    } else {
    }
    %c0 = arith.constant 0 : index
    %c0_1 = arith.constant 0 : index
    %3 = vector.load %arg10[%c0, %c0_1] : memref<16x64xbf16, #tpu.memory_space<vmem>>, vector<16x64xbf16>
    %c0_2 = arith.constant 0 : index
    %c0_3 = arith.constant 0 : index
    %4 = vector.load %arg7[%c0_2, %c0_3] : memref<64x128xbf16, #tpu.memory_space<vmem>>, vector<64x128xbf16>
    %cst = arith.constant dense<0.000000e+00> : vector<16x128xf32>
    %5 = tpu.matmul %3, %4, %cst {dimension_numbers = #tpu.dot_dimension_numbers<[1], [0], [0], [1], [0, 0, 1, 1], [], []>} : vector<16x64xbf16>, vector<64x128xbf16>, vector<16x128xf32> -> vector<16x128xf32>
    %c0_4 = arith.constant 0 : index
    %c0_5 = arith.constant 0 : index
    %6 = vector.load %arg8[%c0_4, %c0_5] : memref<1x128xf32, #tpu.memory_space<vmem>>, vector<1x128xf32>
    %7 = vector.broadcast %6 : vector<1x128xf32> to vector<16x128xf32>
    %8 = arith.addf %5, %7 : vector<16x128xf32>
    %c0_6 = arith.constant 0 : index
    %c0_7 = arith.constant 0 : index
    %9 = vector.load %arg9[%c0_6, %c0_7] : memref<16x128xf32, #tpu.memory_space<vmem>>, vector<16x128xf32>
    tpu.vector_store %arg9[%c0_6, %c0_7], %8 {strides = array<i32>} : memref<16x128xf32, #tpu.memory_space<vmem>>, vector<16x128xf32>,
    return
  }
  func.func @transform_0(%arg0: i32, %arg1: i32) -> (i32, i32) {
    %c0_i32 = arith.constant 0 : i32
    %c0_i32_0 = arith.constant 0 : i32
    return %arg0, %c0_i32 : i32, i32
  }
  func.func @transform_1(%arg0: i32, %arg1: i32) -> (i32, i32) {
    %c0_i32 = arith.constant 0 : i32
    %c0_i32_0 = arith.constant 0 : i32
    %c0_i32_1 = arith.constant 0 : i32
    return %c0_i32, %c0_i32_0 : i32, i32
  }
  func.func @transform_2(%arg0: i32, %arg1: i32) -> (i32, i32) {
    %c0_i32 = arith.constant 0 : i32
    %c0_i32_0 = arith.constant 0 : i32
    %c0_i32_1 = arith.constant 0 : i32
    return %c0_i32, %c0_i32_0 : i32, i32
  }
  func.func @transform_3(%arg0: i32, %arg1: i32) -> (i32, i32) {
    %c0_i32 = arith.constant 0 : i32
    %c0_i32_0 = arith.constant 0 : i32
    %c0_i32_1 = arith.constant 0 : i32
    return %c0_i32, %c0_i32_0 : i32, i32
  }
  func.func @transform_4(%arg0: i32, %arg1: i32) -> (i32, i32) {
    %c0_i32 = arith.constant 0 : i32
    %c0_i32_0 = arith.constant 0 : i32
    %c0_i32_1 = arith.constant 0 : i32
    return %c0_i32, %c0_i32_0 : i32, i32
  }
  func.func @transform_5(%arg0: i32, %arg1: i32) -> (i32, i32) {
    %c0_i32 = arith.constant 0 : i32
    %c0_i32_0 = arith.constant 0 : i32
    return %c0_i32, %arg1 : i32, i32
  }
  func.func @transform_6(%arg0: i32, %arg1: i32) -> (i32, i32) {
    %c0_i32 = arith.constant 0 : i32
    %c0_i32_0 = arith.constant 0 : i32
    return %c0_i32, %arg1 : i32, i32
  }
  func.func @transform_7(%arg0: i32, %arg1: i32) -> (i32, i32) {
    %c0_i32 = arith.constant 0 : i32
    return %arg0, %arg1 : i32, i32
  }
}

module attributes {stable_mosaic.version = 11 : i64} {
  func.func @logit_fc_kernel(%arg0: i32, %arg1: i32, %arg2: memref<16x32xbf16, #tpu.memory_space<vmem>>, %arg3: memref<32x64xbf16, #tpu.memory_space<vmem>>, %arg4: memref<1x64xf32, #tpu.memory_space<vmem>>, %arg5: memref<1x64xf32, #tpu.memory_space<vmem>>, %arg6: memref<1x64xf32, #tpu.memory_space<vmem>>, %arg7: memref<64x128xbf16, #tpu.memory_space<vmem>>, %arg8: memref<1x128xf32, #tpu.memory_space<vmem>>, %arg9: memref<16x128xf32, #tpu.memory_space<vmem>>, %arg10: memref<16x64xbf16, #tpu.memory_space<vmem>>) attributes {dimension_semantics = [#tpu.dimension_semantics<parallel>, #tpu.dimension_semantics<arbitrary>], iteration_bounds = array<i64: 1, 1>, scalar_prefetch = 0 : i64, scratch_operands = 1 : i64, tpu.core_type = #tpu.core_type<tc>, window_params = [{transform_indices = @transform_0, window_bounds = array<i64: 16, 32>}, {pipeline_mode = #tpu.pipeline_mode<synchronous>, transform_indices = @transform_1, window_bounds = array<i64: 32, 64>}, {pipeline_mode = #tpu.pipeline_mode<synchronous>, transform_indices = @transform_2, window_bounds = array<i64: 1, 64>}, {pipeline_mode = #tpu.pipeline_mode<synchronous>, transform_indices = @transform_3, window_bounds = array<i64: 1, 64>}, {pipeline_mode = #tpu.pipeline_mode<synchronous>, transform_indices = @transform_4, window_bounds = array<i64: 1, 64>}, {transform_indices = @transform_5, window_bounds = array<i64: 64, 128>}, {transform_indices = @transform_6, window_bounds = array<i64: 1, 128>}, {transform_indices = @transform_7, window_bounds = array<i64: 16, 128>}]} {
    %c0_i32 = arith.constant 0 : i32
    %0 = arith.cmpi eq, %arg1, %c0_i32 : i32
    %1 = arith.extui %0 : i1 to i32
    %c0_i32_0 = arith.constant 0 : i32
    %2 = arith.cmpi ne, %1, %c0_i32_0 : i32
    scf.if %2 {
      %c0_8 = arith.constant 0 : index
      %c0_9 = arith.constant 0 : index
      %10 = vector.load %arg2[%c0_8, %c0_9] : memref<16x32xbf16, #tpu.memory_space<vmem>>, vector<16x32xbf16>
      %c0_10 = arith.constant 0 : index
      %c0_11 = arith.constant 0 : index
      %11 = vector.load %arg3[%c0_10, %c0_11] : memref<32x64xbf16, #tpu.memory_space<vmem>>, vector<32x64xbf16>
      %cst_12 = arith.constant dense<0.000000e+00> : vector<16x64xf32>
      %12 = tpu.matmul %10, %11, %cst_12 {dimension_numbers = #tpu.dot_dimension_numbers<[1], [0], [0], [1], [0, 0, 1, 1], [], []>} : vector<16x32xbf16>, vector<32x64xbf16>, vector<16x64xf32> -> vector<16x64xf32>
      %c0_13 = arith.constant 0 : index
      %c0_14 = arith.constant 0 : index
      %13 = vector.load %arg4[%c0_13, %c0_14] : memref<1x64xf32, #tpu.memory_space<vmem>>, vector<1x64xf32>
      %14 = vector.broadcast %13 : vector<1x64xf32> to vector<16x64xf32>
      %15 = arith.addf %12, %14 : vector<16x64xf32>
      %cst_15 = arith.constant 5.000000e-01 : f32
      %16 = vector.broadcast %cst_15 : f32 to vector<16x64xf32>
      %17 = arith.mulf %15, %16 : vector<16x64xf32>
      %cst_16 = arith.constant 0.707106769 : f32
      %18 = vector.broadcast %cst_16 : f32 to vector<16x64xf32>
      %19 = arith.mulf %15, %18 : vector<16x64xf32>
      %20 = math.erf %19 : vector<16x64xf32>
      %cst_17 = arith.constant 1.000000e+00 : f32
      %21 = vector.broadcast %cst_17 : f32 to vector<16x64xf32>
      %22 = arith.addf %21, %20 : vector<16x64xf32>
      %23 = arith.mulf %17, %22 : vector<16x64xf32>
      %cst_18 = arith.constant dense<0.000000e+00> : vector<16xf32>
      %24 = vector.multi_reduction <add>, %23, %cst_18 [1] : vector<16x64xf32> to vector<16xf32>
      %25 = vector.shape_cast %24 : vector<16xf32> to vector<16x1xf32>
      %cst_19 = arith.constant 6.400000e+01 : f32
      %26 = vector.broadcast %cst_19 : f32 to vector<16x1xf32>
      %27 = arith.divf %25, %26 : vector<16x1xf32>
      %28 = vector.broadcast %27 : vector<16x1xf32> to vector<16x64xf32>
      %29 = arith.subf %23, %28 : vector<16x64xf32>
      %30 = arith.mulf %29, %29 : vector<16x64xf32>
      %cst_20 = arith.constant dense<0.000000e+00> : vector<16xf32>
      %31 = vector.multi_reduction <add>, %30, %cst_20 [1] : vector<16x64xf32> to vector<16xf32>
      %32 = vector.shape_cast %31 : vector<16xf32> to vector<16x1xf32>
      %cst_21 = arith.constant 6.400000e+01 : f32
      %33 = vector.broadcast %cst_21 : f32 to vector<16x1xf32>
      %34 = arith.divf %32, %33 : vector<16x1xf32>
      %35 = vector.broadcast %27 : vector<16x1xf32> to vector<16x64xf32>
      %36 = arith.subf %23, %35 : vector<16x64xf32>
      %cst_22 = arith.constant 9.99999996E-13 : f32
      %37 = vector.broadcast %cst_22 : f32 to vector<16x1xf32>
      %38 = arith.addf %34, %37 : vector<16x1xf32>
      %39 = math.rsqrt %38 : vector<16x1xf32>
      %40 = vector.broadcast %39 : vector<16x1xf32> to vector<16x64xf32>
      %41 = arith.mulf %36, %40 : vector<16x64xf32>
      %c0_23 = arith.constant 0 : index
      %c0_24 = arith.constant 0 : index
      %42 = vector.load %arg5[%c0_23, %c0_24] : memref<1x64xf32, #tpu.memory_space<vmem>>, vector<1x64xf32>
      %43 = vector.broadcast %42 : vector<1x64xf32> to vector<16x64xf32>
      %44 = arith.mulf %41, %43 : vector<16x64xf32>
      %c0_25 = arith.constant 0 : index
      %c0_26 = arith.constant 0 : index
      %45 = vector.load %arg6[%c0_25, %c0_26] : memref<1x64xf32, #tpu.memory_space<vmem>>, vector<1x64xf32>
      %46 = vector.broadcast %45 : vector<1x64xf32> to vector<16x64xf32>
      %47 = arith.addf %44, %46 : vector<16x64xf32>
      %48 = arith.truncf %47 : vector<16x64xf32> to vector<16x64xbf16>
      %c0_27 = arith.constant 0 : index
      %c0_28 = arith.constant 0 : index
      %49 = vector.load %arg10[%c0_27, %c0_28] : memref<16x64xbf16, #tpu.memory_space<vmem>>, vector<16x64xbf16>
      tpu.vector_store %arg10[%c0_27, %c0_28], %48 {strides = array<i32>} : memref<16x64xbf16, #tpu.memory_space<vmem>>, vector<16x64xbf16>,
    } else {
    }
    %c0 = arith.constant 0 : index
    %c0_1 = arith.constant 0 : index
    %3 = vector.load %arg10[%c0, %c0_1] : memref<16x64xbf16, #tpu.memory_space<vmem>>, vector<16x64xbf16>
    %c0_2 = arith.constant 0 : index
    %c0_3 = arith.constant 0 : index
    %4 = vector.load %arg7[%c0_2, %c0_3] : memref<64x128xbf16, #tpu.memory_space<vmem>>, vector<64x128xbf16>
    %cst = arith.constant dense<0.000000e+00> : vector<16x128xf32>
    %5 = tpu.matmul %3, %4, %cst {dimension_numbers = #tpu.dot_dimension_numbers<[1], [0], [0], [1], [0, 0, 1, 1], [], []>} : vector<16x64xbf16>, vector<64x128xbf16>, vector<16x128xf32> -> vector<16x128xf32>
    %c0_4 = arith.constant 0 : index
    %c0_5 = arith.constant 0 : index
    %6 = vector.load %arg8[%c0_4, %c0_5] : memref<1x128xf32, #tpu.memory_space<vmem>>, vector<1x128xf32>
    %7 = vector.broadcast %6 : vector<1x128xf32> to vector<16x128xf32>
    %8 = arith.addf %5, %7 : vector<16x128xf32>
    %c0_6 = arith.constant 0 : index
    %c0_7 = arith.constant 0 : index
    %9 = vector.load %arg9[%c0_6, %c0_7] : memref<16x128xf32, #tpu.memory_space<vmem>>, vector<16x128xf32>
    tpu.vector_store %arg9[%c0_6, %c0_7], %8 {strides = array<i32>} : memref<16x128xf32, #tpu.memory_space<vmem>>, vector<16x128xf32>,
    return
  }
  func.func @transform_0(%arg0: i32, %arg1: i32) -> (i32, i32) {
    %c0_i32 = arith.constant 0 : i32
    %c0_i32_0 = arith.constant 0 : i32
    return %arg0, %c0_i32 : i32, i32
  }
  func.func @transform_1(%arg0: i32, %arg1: i32) -> (i32, i32) {
    %c0_i32 = arith.constant 0 : i32
    %c0_i32_0 = arith.constant 0 : i32
    %c0_i32_1 = arith.constant 0 : i32
    return %c0_i32, %c0_i32_0 : i32, i32
  }
  func.func @transform_2(%arg0: i32, %arg1: i32) -> (i32, i32) {
    %c0_i32 = arith.constant 0 : i32
    %c0_i32_0 = arith.constant 0 : i32
    %c0_i32_1 = arith.constant 0 : i32
    return %c0_i32, %c0_i32_0 : i32, i32
  }
  func.func @transform_3(%arg0: i32, %arg1: i32) -> (i32, i32) {
    %c0_i32 = arith.constant 0 : i32
    %c0_i32_0 = arith.constant 0 : i32
    %c0_i32_1 = arith.constant 0 : i32
    return %c0_i32, %c0_i32_0 : i32, i32
  }
  func.func @transform_4(%arg0: i32, %arg1: i32) -> (i32, i32) {
    %c0_i32 = arith.constant 0 : i32
    %c0_i32_0 = arith.constant 0 : i32
    %c0_i32_1 = arith.constant 0 : i32
    return %c0_i32, %c0_i32_0 : i32, i32
  }
  func.func @transform_5(%arg0: i32, %arg1: i32) -> (i32, i32) {
    %c0_i32 = arith.constant 0 : i32
    %c0_i32_0 = arith.constant 0 : i32
    return %c0_i32, %arg1 : i32, i32
  }
  func.func @transform_6(%arg0: i32, %arg1: i32) -> (i32, i32) {
    %c0_i32 = arith.constant 0 : i32
    %c0_i32_0 = arith.constant 0 : i32
    return %c0_i32, %arg1 : i32, i32
  }
  func.func @transform_7(%arg0: i32, %arg1: i32) -> (i32, i32) {
    %c0_i32 = arith.constant 0 : i32
    return %arg0, %arg1 : i32, i32
  }
}

</mosaic_0001>

<llo_original>
// kernel: tpu_custom_call.1
$region0: #{tpu_custom_call.1}
  #allocation0 [shape = 'u32[]', space=smem, size = 0x4, offset = 0x4, fixed_abs, tag = 'smem constant byte address 0x4 - core index']
  #allocation1 [shape = 'u32[144,128]{1,0:T(1,128)}', space=vmem, size = 0x12000, scoped, tag = 'internal scratch']
  #allocation2 [shape = 'bf16[16,64]{1,0:T(16,128)(2,1)}', space=vmem, size = 0x1000, scoped, tag = 'scratch operand']
  %s0 = inlined_call_operand.hbm [shape: bf16[16,32], index: 0, kind: input, shape index: {}]
  %s1 = inlined_call_operand.hbm [shape: bf16[32,64], index: 1, kind: input, shape index: {}]
  %s2 = inlined_call_operand.vmem [shape: f32[1,64], index: 2, kind: input, shape index: {}]
  %s3 = inlined_call_operand.vmem [shape: f32[1,64], index: 3, kind: input, shape index: {}]
  %s4 = inlined_call_operand.vmem [shape: f32[1,64], index: 4, kind: input, shape index: {}]
  %s5 = inlined_call_operand.hbm [shape: bf16[64,128], index: 5, kind: input, shape index: {}]
  %s6 = inlined_call_operand.vmem [shape: f32[1,128], index: 6, kind: input, shape index: {}]
  %s7 = inlined_call_operand.hbm [shape: f32[16,128], index: 7, kind: output, shape index: {}]
  %s8 = sld [smem:[#allocation0]]
  $region54: #{tpu_custom_call.1} parent=0
    _
  %s10 = ssub.s32 1, %s8
  %s11 = scalar_select 0, %s10, %s8
  $region1: #{tpu_custom_call.1} parent=0
    #allocation3 [shape = 'u8[4096]{0}', space=vmem, size = 0x1000, scoped, tag = 'input window, operand 0, single buffered']
    #allocation4 [shape = 's32[1]{0}', space=sflag, size = 0x4, scoped, tag = 'scoped memory for tpu_custom_call.1']
    #allocation5 [shape = 's32[1]{0}', space=sflag, size = 0x4, scoped, tag = 'scoped memory for tpu_custom_call.1']
    #allocation6 [shape = 'u8[8192]{0}', space=vmem, size = 0x2000, scoped, tag = 'input window, operand 1, single buffered']
    #allocation7 [shape = 's32[1]{0}', space=sflag, size = 0x4, scoped, tag = 'scoped memory for tpu_custom_call.1']
    #allocation8 [shape = 'u8[16384]{0}', space=vmem, size = 0x4000, scoped, tag = 'input window, operand 5, single buffered']
    #allocation9 [shape = 'u8[8192]{0}', space=vmem, size = 0x2000, scoped, tag = 'output window, operand 0, single buffered']
    %12 = vsyncpa [#allocation4], 0
    %13 = vsyncpa [#allocation7], 0
    %14 = vsyncpa [#allocation5], 0
    // Predicated region
    $region2: #{tpu_custom_call.1} parent=1 // pred_check
      _
    $region3: #{tpu_custom_call.1} parent=1 // pred_check_branch
      %16 = sbr.rel (0) target = $region5
    $region4: #{tpu_custom_call.1} parent=1 // pred_region
      %s18 = ssub.s32 128, 128
      %19 = vsyncadd [#allocation4], %s18
      %s20 = sshll.u32 [#allocation3], 4
      %s21 = int_to_ptr.vmem [resolvable:$true] %s20
      %26 = dma.hbm_to_vmem [thread:$0]  %s0, 128, %s21, [#allocation4], 64, 64, 4
    $region5: #{tpu_custom_call.1} parent=1 // pred_fallthru
      _
    // Predicated region
    $region6: #{tpu_custom_call.1} parent=1 // pred_check
      _
    $region7: #{tpu_custom_call.1} parent=1 // pred_check_branch
      %28 = sbr.rel (0) target = $region9
    $region8: #{tpu_custom_call.1} parent=1 // pred_region
      %s30 = ssub.s32 256, 256
      %31 = vsyncadd [#allocation7], %s30
      %s32 = sshll.u32 [#allocation6], 4
      %s33 = int_to_ptr.vmem [resolvable:$true] %s32
      %38 = dma.hbm_to_vmem [thread:$0]  %s1, 256, %s33, [#allocation7], 64, 64, 4
    $region9: #{tpu_custom_call.1} parent=1 // pred_fallthru
      _
    // Predicated region
    $region10: #{tpu_custom_call.1} parent=1 // pred_check
      _
    $region11: #{tpu_custom_call.1} parent=1 // pred_check_branch
      %40 = sbr.rel (0) target = $region13
    $region12: #{tpu_custom_call.1} parent=1 // pred_region
      _
    $region13: #{tpu_custom_call.1} parent=1 // pred_fallthru
      _
    // Predicated region
    $region14: #{tpu_custom_call.1} parent=1 // pred_check
      _
    $region15: #{tpu_custom_call.1} parent=1 // pred_check_branch
      %42 = sbr.rel (0) target = $region17
    $region16: #{tpu_custom_call.1} parent=1 // pred_region
      _
    $region17: #{tpu_custom_call.1} parent=1 // pred_fallthru
      _
    // Predicated region
    $region18: #{tpu_custom_call.1} parent=1 // pred_check
      _
    $region19: #{tpu_custom_call.1} parent=1 // pred_check_branch
      %44 = sbr.rel (0) target = $region21
    $region20: #{tpu_custom_call.1} parent=1 // pred_region
      _
    $region21: #{tpu_custom_call.1} parent=1 // pred_fallthru
      _
    // Predicated region
    $region22: #{tpu_custom_call.1} parent=1 // pred_check
      _
    $region23: #{tpu_custom_call.1} parent=1 // pred_check_branch
      %46 = sbr.rel (0) target = $region25
    $region24: #{tpu_custom_call.1} parent=1 // pred_region
      %s48 = ssub.s32 512, 512
      %49 = vsyncadd [#allocation7], %s48
      %s50 = sshll.u32 [#allocation8], 4
      %s51 = int_to_ptr.vmem [resolvable:$true] %s50
      %56 = dma.hbm_to_vmem [thread:$0]  %s5, 512, %s51, [#allocation7], 64, 64, 4
    $region25: #{tpu_custom_call.1} parent=1 // pred_fallthru
      _
    // Predicated region
    $region26: #{tpu_custom_call.1} parent=1 // pred_check
      _
    $region27: #{tpu_custom_call.1} parent=1 // pred_check_branch
      %58 = sbr.rel (0) target = $region29
    $region28: #{tpu_custom_call.1} parent=1 // pred_region
      _
    $region29: #{tpu_custom_call.1} parent=1 // pred_fallthru
      _
    // Predicated region
    $region30: #{tpu_custom_call.1} parent=1 // pred_check
      _
    $region31: #{tpu_custom_call.1} parent=1 // pred_check_branch
      %60 = sbr.rel (0) target = $region33
    $region32: #{tpu_custom_call.1} parent=1 // pred_region
      %61 = dma.done [#allocation4], 128
    $region33: #{tpu_custom_call.1} parent=1 // pred_fallthru
      _
    // Predicated region
    $region34: #{tpu_custom_call.1} parent=1 // pred_check
      _
    $region35: #{tpu_custom_call.1} parent=1 // pred_check_branch
      %63 = sbr.rel (0) target = $region37
    $region36: #{tpu_custom_call.1} parent=1 // pred_region
      %64 = dma.done [#allocation7], 256
    $region37: #{tpu_custom_call.1} parent=1 // pred_fallthru
      _
    // Predicated region
    $region38: #{tpu_custom_call.1} parent=1 // pred_check
      _
    $region39: #{tpu_custom_call.1} parent=1 // pred_check_branch
      %66 = sbr.rel (0) target = $region41
    $region40: #{tpu_custom_call.1} parent=1 // pred_region
      %67 = dma.done [#allocation7], 512
    $region41: #{tpu_custom_call.1} parent=1 // pred_fallthru
      _
    %p69 = scmp.eq.s32.totalorder 0, 0
    // Predicated region
    $region42: #{tpu_custom_call.1} parent=1 // pred_check
      %p70 = pneg %p69
    $region43: #{tpu_custom_call.1} parent=1 // pred_check_branch
      %72 = sbr.rel (%p70) target = $region45
    $region44: #{tpu_custom_call.1} parent=1 // pred_region
      %v73 = vld [vmem:[#allocation3] sm:$0xf]
      %v74 = vld [vmem:[#allocation3 + $0x4] sm:$0xf]
      %v75 = vld [vmem:[#allocation6] sm:$0xf]
      %v76 = vld [vmem:[#allocation6 + $0x4] sm:$0xf]
      %v77 = vld [vmem:[#allocation6 + $0x8] sm:$0xf]
      %v78 = vld [vmem:[#allocation6 + $0xc] sm:$0xf]
      %v79 = vld [vmem:[%s2] sm:$0x1]
      %v81 = vlaneseq
      %v82 = vshrl.u32 %v81, 7
      %v83 = vsub.s32 0, %v82
      %v84 = vrot.slane %v79, %v83
      %v88 = vunpack.c.l.b16 %v73
      %v89 = vunpack.c.l.b16 %v74
      %v90 = vpack.c.b16 %v89, %v88
      %v95 = vunpack.c.l.b16 %v75
      %v96 = vunpack.c.l.b16 %v76
      %v97 = vunpack.c.l.b16 %v77
      %v98 = vunpack.c.l.b16 %v78
      %v99 = vpack.c.b16 %v96, %v95
      %v100 = vpack.c.b16 %v98, %v97
      %vm103 = vcmask 261120
      %v105 = vsel %vm103, %v90, 0
      %107 = vmatprep.subr.bf16.mxu0 0
      %108 = vmatpush1.bf16.msra.mxu0 %v99
      %109 = vmatprep.subr.bf16.mxu0 0
      %110 = vmatpush1.bf16.msra.mxu0 %v100
      %111 = vmatprep.subr.bf16.mxu0 0
      %112 = vmatpush1.bf16.msra.mxu0 0
      %113 = vmatprep.subr.bf16.mxu0 0
      %114 = vmatpush1.bf16.msra.mxu0 0
      %115 = vmatprep.subr.bf16.mxu0 0
      %116 = vmatpush1.bf16.msra.mxu0 0
      %117 = vmatprep.subr.bf16.mxu0 0
      %118 = vmatpush1.bf16.msra.mxu0 0
      %119 = vmatprep.subr.bf16.mxu0 0
      %120 = vmatpush1.bf16.msra.mxu0 0
      %121 = vmatprep.subr.bf16.mxu0 0
      %122 = vmatpush1.bf16.msra.mxu0 0
      %123 = vmatprep.subr.bf16.mxu0 0
      %124 = vmatpush1.bf16.msra.mxu0 0
      %125 = vmatprep.subr.bf16.mxu0 0
      %126 = vmatpush1.bf16.msra.mxu0 0
      %127 = vmatprep.subr.bf16.mxu0 0
      %128 = vmatpush1.bf16.msra.mxu0 0
      %129 = vmatprep.subr.bf16.mxu0 0
      %130 = vmatpush1.bf16.msra.mxu0 0
      %131 = vmatprep.subr.bf16.mxu0 0
      %132 = vmatpush1.bf16.msra.mxu0 0
      %133 = vmatprep.subr.bf16.mxu0 0
      %134 = vmatpush1.bf16.msra.mxu0 0
      %135 = vmatprep.subr.bf16.mxu0 0
      %136 = vmatpush1.bf16.msra.mxu0 0
      %137 = vmatprep.subr.bf16.mxu0 0
      %138 = vmatpush1.bf16.msra.mxu0 0
      %139 = vmatprep.mubr.bf16.mxu0 0
      %140 = vmatmul.mubr.bf16.gmra.mrb[0].mxu0 %v105
      %v141 = vpop.f32.mrb[0].mxu0
      %v142 = vadd.f32 %v84, %v141
      %v143 = vpop.f32.mrb[0].mxu0
      %v144 = vpop.f32.mrb[0].mxu0
      %v145 = vadd.f32 %v84, %v144
      %v146 = vpop.f32.mrb[0].mxu0
      %147 = vdwg.mxu0
      %v148 = vmul.f32 %v142, 0.5
      %v149 = vmul.f32 %v145, 0.5
      %v150 = vmul.f32 %v142, 0.70710677
      %v151 = vmul.f32 %v145, 0.70710677
      %v152 = verf.f32.pop %v150
      %v153 = verf.f32.pop %v151
      %v154 = vadd.f32 %v152, 1.0
      %v155 = vadd.f32 %v153, 1.0
      %v156 = vmul.f32 %v148, %v154
      %v157 = vmul.f32 %v149, %v155
      %vm158 = vcmask 523264
      %v159 = vsel %vm158, %v156, 0.0
      %160 = vadd.xlane.f32.xlu0 %v159
      %v161 = vpop.xlane.xlu0 %160
      %v162 = vsel %vm158, %v157, 0.0
      %163 = vadd.xlane.f32.xlu0 %v162
      %v164 = vpop.xlane.xlu0 %163
      %v165 = vrcp.pop 64.0
      %v166 = vmul.f32 %v161, %v165
      %v167 = vmul.f32 %v164, %v165
      %v168 = vsub.f32 %v156, %v166
      %v169 = vsub.f32 %v157, %v167
      %v170 = vmul.f32 %v168, %v168
      %v171 = vmul.f32 %v169, %v169
      %v172 = vsel %vm158, %v170, 0.0
      %173 = vadd.xlane.f32.xlu0 %v172
      %v174 = vpop.xlane.xlu0 %173
      %v175 = vsel %vm158, %v171, 0.0
      %176 = vadd.xlane.f32.xlu0 %v175
      %v177 = vpop.xlane.xlu0 %176
      %v178 = vmul.f32 %v174, %v165
      %v179 = vmul.f32 %v177, %v165
      %v180 = vadd.f32 %v178, 1e-12
      %v181 = vadd.f32 %v179, 1e-12
      %v182 = vrsqrt.pop %v180
      %v183 = vrsqrt.pop %v181
      %v184 = vmul.f32 %v168, %v182
      %v185 = vmul.f32 %v169, %v183
      %v186 = vld [vmem:[%s3] sm:$0x1]
      %v188 = vlaneseq
      %v189 = vshrl.u32 %v188, 7
      %v190 = vsub.s32 0, %v189
      %v191 = vrot.slane %v186, %v190
      %v193 = vmul.f32 %v184, %v191
      %v194 = vmul.f32 %v185, %v191
      %v195 = vld [vmem:[%s4] sm:$0x1]
      %v197 = vlaneseq
      %v198 = vshrl.u32 %v197, 7
      %v199 = vsub.s32 0, %v198
      %v200 = vrot.slane %v195, %v199
      %v202 = vadd.f32 %v193, %v200
      %v203 = vadd.f32 %v194, %v200
      %v204 = vpack.c.bf16 %v203, %v202
      %205 = vst.msk [vmem:[#allocation2] sm:$0xff] %vm158, %v204
    $region45: #{tpu_custom_call.1} parent=1 // pred_fallthru
      _
    %v206 = vld [vmem:[#allocation2] sm:$0xff]
    %v207 = vld [vmem:[#allocation8] sm:$0xf]
    %v208 = vld [vmem:[#allocation8 + $0x4] sm:$0xf]
    %v209 = vld [vmem:[#allocation8 + $0x8] sm:$0xf]
    %v210 = vld [vmem:[#allocation8 + $0xc] sm:$0xf]
    %v211 = vld [vmem:[#allocation8 + $0x10] sm:$0xf]
    %v212 = vld [vmem:[#allocation8 + $0x14] sm:$0xf]
    %v213 = vld [vmem:[#allocation8 + $0x18] sm:$0xf]
    %v214 = vld [vmem:[#allocation8 + $0x1c] sm:$0xf]
    %v215 = vld [vmem:[%s6] sm:$0x1]
    %v217 = vlaneseq
    %v218 = vshrl.u32 %v217, 7
    %v219 = vsub.s32 0, %v218
    %v220 = vrot.slane %v215, %v219
    %v230 = vunpack.c.l.b16 %v207
    %v231 = vunpack.c.l.b16 %v208
    %v232 = vunpack.c.l.b16 %v209
    %v233 = vunpack.c.l.b16 %v210
    %v234 = vunpack.c.l.b16 %v211
    %v235 = vunpack.c.l.b16 %v212
    %v236 = vunpack.c.l.b16 %v213
    %v237 = vunpack.c.l.b16 %v214
    %v238 = vpack.c.b16 %v231, %v230
    %v239 = vpack.c.b16 %v233, %v232
    %v240 = vpack.c.b16 %v235, %v234
    %v241 = vpack.c.b16 %v237, %v236
    %vm246 = vcmask 523264
    %v248 = vsel %vm246, %v206, 0
    %250 = vmatprep.subr.bf16.mxu0 0
    %251 = vmatpush1.bf16.msra.mxu0 %v238
    %252 = vmatprep.subr.bf16.mxu0 0
    %253 = vmatpush1.bf16.msra.mxu0 %v239
    %254 = vmatprep.subr.bf16.mxu0 0
    %255 = vmatpush1.bf16.msra.mxu0 %v240
    %256 = vmatprep.subr.bf16.mxu0 0
    %257 = vmatpush1.bf16.msra.mxu0 %v241
    %258 = vmatprep.subr.bf16.mxu0 0
    %259 = vmatpush1.bf16.msra.mxu0 0
    %260 = vmatprep.subr.bf16.mxu0 0
    %261 = vmatpush1.bf16.msra.mxu0 0
    %262 = vmatprep.subr.bf16.mxu0 0
    %263 = vmatpush1.bf16.msra.mxu0 0
    %264 = vmatprep.subr.bf16.mxu0 0
    %265 = vmatpush1.bf16.msra.mxu0 0
    %266 = vmatprep.subr.bf16.mxu0 0
    %267 = vmatpush1.bf16.msra.mxu0 0
    %268 = vmatprep.subr.bf16.mxu0 0
    %269 = vmatpush1.bf16.msra.mxu0 0
    %270 = vmatprep.subr.bf16.mxu0 0
    %271 = vmatpush1.bf16.msra.mxu0 0
    %272 = vmatprep.subr.bf16.mxu0 0
    %273 = vmatpush1.bf16.msra.mxu0 0
    %274 = vmatprep.subr.bf16.mxu0 0
    %275 = vmatpush1.bf16.msra.mxu0 0
    %276 = vmatprep.subr.bf16.mxu0 0
    %277 = vmatpush1.bf16.msra.mxu0 0
    %278 = vmatprep.subr.bf16.mxu0 0
    %279 = vmatpush1.bf16.msra.mxu0 0
    %280 = vmatprep.subr.bf16.mxu0 0
    %281 = vmatpush1.bf16.msra.mxu0 0
    %282 = vmatprep.mubr.bf16.mxu0 0
    %283 = vmatmul.mubr.bf16.gmra.mrb[0].mxu0 %v248
    %v284 = vpop.f32.mrb[0].mxu0
    %v285 = vadd.f32 %v220, %v284
    %v286 = vpop.f32.mrb[0].mxu0
    %v287 = vpop.f32.mrb[0].mxu0
    %v288 = vadd.f32 %v220, %v287
    %v289 = vpop.f32.mrb[0].mxu0
    %290 = vdwg.mxu0
    %291 = vst [vmem:[#allocation9] sm:$0xff] %v285
    %292 = vst [vmem:[#allocation9 + $0x8] sm:$0xff] %v288
    // Predicated region
    $region46: #{tpu_custom_call.1} parent=1 // pred_check
      _
    $region47: #{tpu_custom_call.1} parent=1 // pred_check_branch
      %294 = sbr.rel (0) target = $region49
    $region48: #{tpu_custom_call.1} parent=1 // pred_region
      %s296 = ssub.s32 256, 256
      %297 = vsyncadd [#allocation5], %s296
      %s298 = sshll.u32 [#allocation9], 4
      %s299 = int_to_ptr.vmem [resolvable:$true] %s298
      %304 = dma.vmem_to_hbm [thread:$0]  %s299, 256, %s7, [#allocation5], 128, 128, 8
    $region49: #{tpu_custom_call.1} parent=1 // pred_fallthru
      _
    // Predicated region
    $region50: #{tpu_custom_call.1} parent=1 // pred_check
      _
    $region51: #{tpu_custom_call.1} parent=1 // pred_check_branch
      %306 = sbr.rel (0) target = $region53
    $region52: #{tpu_custom_call.1} parent=1 // pred_region
      %307 = dma.done [#allocation5], 256
    $region53: #{tpu_custom_call.1} parent=1 // pred_fallthru
      _
    %308 = vsyncpa [#allocation4], 1
    %309 = vsyncpa [#allocation7], 1
    %310 = vsyncpa [#allocation5], 1

// kernel: tpu_custom_call.1
$region0: #{tpu_custom_call.1}
  #allocation0 [shape = 'u32[]', space=smem, size = 0x4, offset = 0x4, fixed_abs, tag = 'smem constant byte address 0x4 - core index']
  #allocation1 [shape = 'u32[144,128]{1,0:T(1,128)}', space=vmem, size = 0x12000, scoped, tag = 'internal scratch']
  #allocation2 [shape = 'bf16[16,64]{1,0:T(16,128)(2,1)}', space=vmem, size = 0x1000, scoped, tag = 'scratch operand']
  %s0 = inlined_call_operand.hbm [shape: bf16[16,32], index: 0, kind: input, shape index: {}]
  %s1 = inlined_call_operand.hbm [shape: bf16[32,64], index: 1, kind: input, shape index: {}]
  %s2 = inlined_call_operand.vmem [shape: f32[1,64], index: 2, kind: input, shape index: {}]
  %s3 = inlined_call_operand.vmem [shape: f32[1,64], index: 3, kind: input, shape index: {}]
  %s4 = inlined_call_operand.vmem [shape: f32[1,64], index: 4, kind: input, shape index: {}]
  %s5 = inlined_call_operand.hbm [shape: bf16[64,128], index: 5, kind: input, shape index: {}]
  %s6 = inlined_call_operand.vmem [shape: f32[1,128], index: 6, kind: input, shape index: {}]
  %s7 = inlined_call_operand.hbm [shape: f32[16,128], index: 7, kind: output, shape index: {}]
  %s8 = sld [smem:[#allocation0]]
  $region54: #{tpu_custom_call.1} parent=0
    _
  %s10 = ssub.s32 1, %s8
  %s11 = scalar_select 0, %s10, %s8
  $region1: #{tpu_custom_call.1} parent=0
    #allocation3 [shape = 'u8[4096]{0}', space=vmem, size = 0x1000, scoped, tag = 'input window, operand 0, single buffered']
    #allocation4 [shape = 's32[1]{0}', space=sflag, size = 0x4, scoped, tag = 'scoped memory for tpu_custom_call.1']
    #allocation5 [shape = 's32[1]{0}', space=sflag, size = 0x4, scoped, tag = 'scoped memory for tpu_custom_call.1']
    #allocation6 [shape = 'u8[8192]{0}', space=vmem, size = 0x2000, scoped, tag = 'input window, operand 1, single buffered']
    #allocation7 [shape = 's32[1]{0}', space=sflag, size = 0x4, scoped, tag = 'scoped memory for tpu_custom_call.1']
    #allocation8 [shape = 'u8[16384]{0}', space=vmem, size = 0x4000, scoped, tag = 'input window, operand 5, single buffered']
    #allocation9 [shape = 'u8[8192]{0}', space=vmem, size = 0x2000, scoped, tag = 'output window, operand 0, single buffered']
    %12 = vsyncpa [#allocation4], 0
    %13 = vsyncpa [#allocation7], 0
    %14 = vsyncpa [#allocation5], 0
    // Predicated region
    $region2: #{tpu_custom_call.1} parent=1 // pred_check
      _
    $region3: #{tpu_custom_call.1} parent=1 // pred_check_branch
      %16 = sbr.rel (0) target = $region5
    $region4: #{tpu_custom_call.1} parent=1 // pred_region
      %s18 = ssub.s32 128, 128
      %19 = vsyncadd [#allocation4], %s18
      %s20 = sshll.u32 [#allocation3], 4
      %s21 = int_to_ptr.vmem [resolvable:$true] %s20
      %26 = dma.hbm_to_vmem [thread:$0]  %s0, 128, %s21, [#allocation4], 64, 64, 4
    $region5: #{tpu_custom_call.1} parent=1 // pred_fallthru
      _
    // Predicated region
    $region6: #{tpu_custom_call.1} parent=1 // pred_check
      _
    $region7: #{tpu_custom_call.1} parent=1 // pred_check_branch
      %28 = sbr.rel (0) target = $region9
    $region8: #{tpu_custom_call.1} parent=1 // pred_region
      %s30 = ssub.s32 256, 256
      %31 = vsyncadd [#allocation7], %s30
      %s32 = sshll.u32 [#allocation6], 4
      %s33 = int_to_ptr.vmem [resolvable:$true] %s32
      %38 = dma.hbm_to_vmem [thread:$0]  %s1, 256, %s33, [#allocation7], 64, 64, 4
    $region9: #{tpu_custom_call.1} parent=1 // pred_fallthru
      _
    // Predicated region
    $region10: #{tpu_custom_call.1} parent=1 // pred_check
      _
    $region11: #{tpu_custom_call.1} parent=1 // pred_check_branch
      %40 = sbr.rel (0) target = $region13
    $region12: #{tpu_custom_call.1} parent=1 // pred_region
      _
    $region13: #{tpu_custom_call.1} parent=1 // pred_fallthru
      _
    // Predicated region
    $region14: #{tpu_custom_call.1} parent=1 // pred_check
      _
    $region15: #{tpu_custom_call.1} parent=1 // pred_check_branch
      %42 = sbr.rel (0) target = $region17
    $region16: #{tpu_custom_call.1} parent=1 // pred_region
      _
    $region17: #{tpu_custom_call.1} parent=1 // pred_fallthru
      _
    // Predicated region
    $region18: #{tpu_custom_call.1} parent=1 // pred_check
      _
    $region19: #{tpu_custom_call.1} parent=1 // pred_check_branch
      %44 = sbr.rel (0) target = $region21
    $region20: #{tpu_custom_call.1} parent=1 // pred_region
      _
    $region21: #{tpu_custom_call.1} parent=1 // pred_fallthru
      _
    // Predicated region
    $region22: #{tpu_custom_call.1} parent=1 // pred_check
      _
    $region23: #{tpu_custom_call.1} parent=1 // pred_check_branch
      %46 = sbr.rel (0) target = $region25
    $region24: #{tpu_custom_call.1} parent=1 // pred_region
      %s48 = ssub.s32 512, 512
      %49 = vsyncadd [#allocation7], %s48
      %s50 = sshll.u32 [#allocation8], 4
      %s51 = int_to_ptr.vmem [resolvable:$true] %s50
      %56 = dma.hbm_to_vmem [thread:$0]  %s5, 512, %s51, [#allocation7], 64, 64, 4
    $region25: #{tpu_custom_call.1} parent=1 // pred_fallthru
      _
    // Predicated region
    $region26: #{tpu_custom_call.1} parent=1 // pred_check
      _
    $region27: #{tpu_custom_call.1} parent=1 // pred_check_branch
      %58 = sbr.rel (0) target = $region29
    $region28: #{tpu_custom_call.1} parent=1 // pred_region
      _
    $region29: #{tpu_custom_call.1} parent=1 // pred_fallthru
      _
    // Predicated region
    $region30: #{tpu_custom_call.1} parent=1 // pred_check
      _
    $region31: #{tpu_custom_call.1} parent=1 // pred_check_branch
      %60 = sbr.rel (0) target = $region33
    $region32: #{tpu_custom_call.1} parent=1 // pred_region
      %61 = dma.done [#allocation4], 128
    $region33: #{tpu_custom_call.1} parent=1 // pred_fallthru
      _
    // Predicated region
    $region34: #{tpu_custom_call.1} parent=1 // pred_check
      _
    $region35: #{tpu_custom_call.1} parent=1 // pred_check_branch
      %63 = sbr.rel (0) target = $region37
    $region36: #{tpu_custom_call.1} parent=1 // pred_region
      %64 = dma.done [#allocation7], 256
    $region37: #{tpu_custom_call.1} parent=1 // pred_fallthru
      _
    // Predicated region
    $region38: #{tpu_custom_call.1} parent=1 // pred_check
      _
    $region39: #{tpu_custom_call.1} parent=1 // pred_check_branch
      %66 = sbr.rel (0) target = $region41
    $region40: #{tpu_custom_call.1} parent=1 // pred_region
      %67 = dma.done [#allocation7], 512
    $region41: #{tpu_custom_call.1} parent=1 // pred_fallthru
      _
    %p69 = scmp.eq.s32.totalorder 0, 0
    // Predicated region
    $region42: #{tpu_custom_call.1} parent=1 // pred_check
      %p70 = pneg %p69
    $region43: #{tpu_custom_call.1} parent=1 // pred_check_branch
      %72 = sbr.rel (%p70) target = $region45
    $region44: #{tpu_custom_call.1} parent=1 // pred_region
      %v73 = vld [vmem:[#allocation3] sm:$0xf]
      %v74 = vld [vmem:[#allocation3 + $0x4] sm:$0xf]
      %v75 = vld [vmem:[#allocation6] sm:$0xf]
      %v76 = vld [vmem:[#allocation6 + $0x4] sm:$0xf]
      %v77 = vld [vmem:[#allocation6 + $0x8] sm:$0xf]
      %v78 = vld [vmem:[#allocation6 + $0xc] sm:$0xf]
      %v79 = vld [vmem:[%s2] sm:$0x1]
      %v81 = vlaneseq
      %v82 = vshrl.u32 %v81, 7
      %v83 = vsub.s32 0, %v82
      %v84 = vrot.slane %v79, %v83
      %v88 = vunpack.c.l.b16 %v73
      %v89 = vunpack.c.l.b16 %v74
      %v90 = vpack.c.b16 %v89, %v88
      %v95 = vunpack.c.l.b16 %v75
      %v96 = vunpack.c.l.b16 %v76
      %v97 = vunpack.c.l.b16 %v77
      %v98 = vunpack.c.l.b16 %v78
      %v99 = vpack.c.b16 %v96, %v95
      %v100 = vpack.c.b16 %v98, %v97
      %vm103 = vcmask 261120
      %v105 = vsel %vm103, %v90, 0
      %107 = vmatprep.subr.bf16.mxu0 0
      %108 = vmatpush1.bf16.msra.mxu0 %v99
      %109 = vmatprep.subr.bf16.mxu0 0
      %110 = vmatpush1.bf16.msra.mxu0 %v100
      %111 = vmatprep.subr.bf16.mxu0 0
      %112 = vmatpush1.bf16.msra.mxu0 0
      %113 = vmatprep.subr.bf16.mxu0 0
      %114 = vmatpush1.bf16.msra.mxu0 0
      %115 = vmatprep.subr.bf16.mxu0 0
      %116 = vmatpush1.bf16.msra.mxu0 0
      %117 = vmatprep.subr.bf16.mxu0 0
      %118 = vmatpush1.bf16.msra.mxu0 0
      %119 = vmatprep.subr.bf16.mxu0 0
      %120 = vmatpush1.bf16.msra.mxu0 0
      %121 = vmatprep.subr.bf16.mxu0 0
      %122 = vmatpush1.bf16.msra.mxu0 0
      %123 = vmatprep.subr.bf16.mxu0 0
      %124 = vmatpush1.bf16.msra.mxu0 0
      %125 = vmatprep.subr.bf16.mxu0 0
      %126 = vmatpush1.bf16.msra.mxu0 0
      %127 = vmatprep.subr.bf16.mxu0 0
      %128 = vmatpush1.bf16.msra.mxu0 0
      %129 = vmatprep.subr.bf16.mxu0 0
      %130 = vmatpush1.bf16.msra.mxu0 0
      %131 = vmatprep.subr.bf16.mxu0 0
      %132 = vmatpush1.bf16.msra.mxu0 0
      %133 = vmatprep.subr.bf16.mxu0 0
      %134 = vmatpush1.bf16.msra.mxu0 0
      %135 = vmatprep.subr.bf16.mxu0 0
      %136 = vmatpush1.bf16.msra.mxu0 0
      %137 = vmatprep.subr.bf16.mxu0 0
      %138 = vmatpush1.bf16.msra.mxu0 0
      %139 = vmatprep.mubr.bf16.mxu0 0
      %140 = vmatmul.mubr.bf16.gmra.mrb[0].mxu0 %v105
      %v141 = vpop.f32.mrb[0].mxu0
      %v142 = vadd.f32 %v84, %v141
      %v143 = vpop.f32.mrb[0].mxu0
      %v144 = vpop.f32.mrb[0].mxu0
      %v145 = vadd.f32 %v84, %v144
      %v146 = vpop.f32.mrb[0].mxu0
      %147 = vdwg.mxu0
      %v148 = vmul.f32 %v142, 0.5
      %v149 = vmul.f32 %v145, 0.5
      %v150 = vmul.f32 %v142, 0.70710677
      %v151 = vmul.f32 %v145, 0.70710677
      %v152 = verf.f32.pop %v150
      %v153 = verf.f32.pop %v151
      %v154 = vadd.f32 %v152, 1.0
      %v155 = vadd.f32 %v153, 1.0
      %v156 = vmul.f32 %v148, %v154
      %v157 = vmul.f32 %v149, %v155
      %vm158 = vcmask 523264
      %v159 = vsel %vm158, %v156, 0.0
      %160 = vadd.xlane.f32.xlu0 %v159
      %v161 = vpop.xlane.xlu0 %160
      %v162 = vsel %vm158, %v157, 0.0
      %163 = vadd.xlane.f32.xlu0 %v162
      %v164 = vpop.xlane.xlu0 %163
      %v165 = vrcp.pop 64.0
      %v166 = vmul.f32 %v161, %v165
      %v167 = vmul.f32 %v164, %v165
      %v168 = vsub.f32 %v156, %v166
      %v169 = vsub.f32 %v157, %v167
      %v170 = vmul.f32 %v168, %v168
      %v171 = vmul.f32 %v169, %v169
      %v172 = vsel %vm158, %v170, 0.0
      %173 = vadd.xlane.f32.xlu0 %v172
      %v174 = vpop.xlane.xlu0 %173
      %v175 = vsel %vm158, %v171, 0.0
      %176 = vadd.xlane.f32.xlu0 %v175
      %v177 = vpop.xlane.xlu0 %176
      %v178 = vmul.f32 %v174, %v165
      %v179 = vmul.f32 %v177, %v165
      %v180 = vadd.f32 %v178, 1e-12
      %v181 = vadd.f32 %v179, 1e-12
      %v182 = vrsqrt.pop %v180
      %v183 = vrsqrt.pop %v181
      %v184 = vmul.f32 %v168, %v182
      %v185 = vmul.f32 %v169, %v183
      %v186 = vld [vmem:[%s3] sm:$0x1]
      %v188 = vlaneseq
      %v189 = vshrl.u32 %v188, 7
      %v190 = vsub.s32 0, %v189
      %v191 = vrot.slane %v186, %v190
      %v193 = vmul.f32 %v184, %v191
      %v194 = vmul.f32 %v185, %v191
      %v195 = vld [vmem:[%s4] sm:$0x1]
      %v197 = vlaneseq
      %v198 = vshrl.u32 %v197, 7
      %v199 = vsub.s32 0, %v198
      %v200 = vrot.slane %v195, %v199
      %v202 = vadd.f32 %v193, %v200
      %v203 = vadd.f32 %v194, %v200
      %v204 = vpack.c.bf16 %v203, %v202
      %205 = vst.msk [vmem:[#allocation2] sm:$0xff] %vm158, %v204
    $region45: #{tpu_custom_call.1} parent=1 // pred_fallthru
      _
    %v206 = vld [vmem:[#allocation2] sm:$0xff]
    %v207 = vld [vmem:[#allocation8] sm:$0xf]
    %v208 = vld [vmem:[#allocation8 + $0x4] sm:$0xf]
    %v209 = vld [vmem:[#allocation8 + $0x8] sm:$0xf]
    %v210 = vld [vmem:[#allocation8 + $0xc] sm:$0xf]
    %v211 = vld [vmem:[#allocation8 + $0x10] sm:$0xf]
    %v212 = vld [vmem:[#allocation8 + $0x14] sm:$0xf]
    %v213 = vld [vmem:[#allocation8 + $0x18] sm:$0xf]
    %v214 = vld [vmem:[#allocation8 + $0x1c] sm:$0xf]
    %v215 = vld [vmem:[%s6] sm:$0x1]
    %v217 = vlaneseq
    %v218 = vshrl.u32 %v217, 7
    %v219 = vsub.s32 0, %v218
    %v220 = vrot.slane %v215, %v219
    %v230 = vunpack.c.l.b16 %v207
    %v231 = vunpack.c.l.b16 %v208
    %v232 = vunpack.c.l.b16 %v209
    %v233 = vunpack.c.l.b16 %v210
    %v234 = vunpack.c.l.b16 %v211
    %v235 = vunpack.c.l.b16 %v212
    %v236 = vunpack.c.l.b16 %v213
    %v237 = vunpack.c.l.b16 %v214
    %v238 = vpack.c.b16 %v231, %v230
    %v239 = vpack.c.b16 %v233, %v232
    %v240 = vpack.c.b16 %v235, %v234
    %v241 = vpack.c.b16 %v237, %v236
    %vm246 = vcmask 523264
    %v248 = vsel %vm246, %v206, 0
    %250 = vmatprep.subr.bf16.mxu0 0
    %251 = vmatpush1.bf16.msra.mxu0 %v238
    %252 = vmatprep.subr.bf16.mxu0 0
    %253 = vmatpush1.bf16.msra.mxu0 %v239
    %254 = vmatprep.subr.bf16.mxu0 0
    %255 = vmatpush1.bf16.msra.mxu0 %v240
    %256 = vmatprep.subr.bf16.mxu0 0
    %257 = vmatpush1.bf16.msra.mxu0 %v241
    %258 = vmatprep.subr.bf16.mxu0 0
    %259 = vmatpush1.bf16.msra.mxu0 0
    %260 = vmatprep.subr.bf16.mxu0 0
    %261 = vmatpush1.bf16.msra.mxu0 0
    %262 = vmatprep.subr.bf16.mxu0 0
    %263 = vmatpush1.bf16.msra.mxu0 0
    %264 = vmatprep.subr.bf16.mxu0 0
    %265 = vmatpush1.bf16.msra.mxu0 0
    %266 = vmatprep.subr.bf16.mxu0 0
    %267 = vmatpush1.bf16.msra.mxu0 0
    %268 = vmatprep.subr.bf16.mxu0 0
    %269 = vmatpush1.bf16.msra.mxu0 0
    %270 = vmatprep.subr.bf16.mxu0 0
    %271 = vmatpush1.bf16.msra.mxu0 0
    %272 = vmatprep.subr.bf16.mxu0 0
    %273 = vmatpush1.bf16.msra.mxu0 0
    %274 = vmatprep.subr.bf16.mxu0 0
    %275 = vmatpush1.bf16.msra.mxu0 0
    %276 = vmatprep.subr.bf16.mxu0 0
    %277 = vmatpush1.bf16.msra.mxu0 0
    %278 = vmatprep.subr.bf16.mxu0 0
    %279 = vmatpush1.bf16.msra.mxu0 0
    %280 = vmatprep.subr.bf16.mxu0 0
    %281 = vmatpush1.bf16.msra.mxu0 0
    %282 = vmatprep.mubr.bf16.mxu0 0
    %283 = vmatmul.mubr.bf16.gmra.mrb[0].mxu0 %v248
    %v284 = vpop.f32.mrb[0].mxu0
    %v285 = vadd.f32 %v220, %v284
    %v286 = vpop.f32.mrb[0].mxu0
    %v287 = vpop.f32.mrb[0].mxu0
    %v288 = vadd.f32 %v220, %v287
    %v289 = vpop.f32.mrb[0].mxu0
    %290 = vdwg.mxu0
    %291 = vst [vmem:[#allocation9] sm:$0xff] %v285
    %292 = vst [vmem:[#allocation9 + $0x8] sm:$0xff] %v288
    // Predicated region
    $region46: #{tpu_custom_call.1} parent=1 // pred_check
      _
    $region47: #{tpu_custom_call.1} parent=1 // pred_check_branch
      %294 = sbr.rel (0) target = $region49
    $region48: #{tpu_custom_call.1} parent=1 // pred_region
      %s296 = ssub.s32 256, 256
      %297 = vsyncadd [#allocation5], %s296
      %s298 = sshll.u32 [#allocation9], 4
      %s299 = int_to_ptr.vmem [resolvable:$true] %s298
      %304 = dma.vmem_to_hbm [thread:$0]  %s299, 256, %s7, [#allocation5], 128, 128, 8
    $region49: #{tpu_custom_call.1} parent=1 // pred_fallthru
      _
    // Predicated region
    $region50: #{tpu_custom_call.1} parent=1 // pred_check
      _
    $region51: #{tpu_custom_call.1} parent=1 // pred_check_branch
      %306 = sbr.rel (0) target = $region53
    $region52: #{tpu_custom_call.1} parent=1 // pred_region
      %307 = dma.done [#allocation5], 256
    $region53: #{tpu_custom_call.1} parent=1 // pred_fallthru
      _
    %308 = vsyncpa [#allocation4], 1
    %309 = vsyncpa [#allocation7], 1
    %310 = vsyncpa [#allocation5], 1

</llo_original>
